<compile_context>
chip_gen: v7x
topology: tpu7x:2x2x1
jax: 0.10.0
libtpu: 0.0.40
codegen_flags: <defaults>
</compile_context>

<pallas_src>
import functools

import jax
import jax.numpy as jnp
from jax import lax
from jax.experimental import pallas as pl
from jax.experimental.pallas import tpu as pltpu


_NCORES = 2                          # megacore split (v7x: 2 TCs; no-op on 1-TC chips)
_FAST_PATH_VMEM_BYTES = 12 * 2**20   # gate for the all-in-VMEM path (fits v7x 32 MiB scoped)
_GATHER_STAGING_BYTES = 8 * 2**20    # budget for the DMA ring buffers in the gather path
_VMEM_LIMIT_BYTES = 32 * 2**20       # explicit scoped-VMEM request (safe on v5e/v6e/v7x)


def _round_up(x, m):
    return (x + m - 1) // m * m


def _cdiv(a, b):
    return -(-a // b)


# ----------------------------------------------------------------------------
# Fast path: both images resident in VMEM, patches extracted in-VMEM.
# ----------------------------------------------------------------------------
def _rploss_vmem_kernel(coords_ref, pre_ref, real_ref, out_ref, *,
                        patch_size, patch_num, per_core, bcp, width):
    """pre_ref / real_ref are (H*bcp, W) with row index h*bcp + bc (channels
    padded to bcp = roundup(B*C, 8)), so a patch's rows are one contiguous,
    8-aligned sublane window.  The y-window is selected with an exact one-hot
    (W, P) matmul (MXU is otherwise idle; avoids dynamic lane slicing and keeps
    the |diff| work on small lane-dense operands)."""
    P = patch_size
    core = pl.program_id(0)
    base = core * per_core

    # Hoisted out of the loop (broadcast/iota are not CSE'd by JAX).
    col = lax.broadcasted_iota(jnp.int32, (width, P), 0)
    off = lax.broadcasted_iota(jnp.int32, (width, P), 1)

    def body(j, acc):
        i = base + j
        x1 = coords_ref[i, 0]
        y1 = coords_ref[i, 1]
        x2 = coords_ref[i, 2]
        y2 = coords_ref[i, 3]

        # Aligned dynamic sublane slices: starts are multiples of 8 because
        # bcp is a multiple of 8.
        r1 = pl.multiple_of(x1 * bcp, 8)
        r2 = pl.multiple_of(x2 * bcp, 8)
        pre_rows = pre_ref[pl.ds(r1, P * bcp), :].astype(jnp.float32)    # (P*bcp, W)
        real_rows = real_ref[pl.ds(r2, P * bcp), :].astype(jnp.float32)

        # One-hot column selectors: out column c takes input column y + c.
        sel_pre = (col == off + y1).astype(jnp.float32)                  # (W, P)
        sel_real = (col == off + y2).astype(jnp.float32)
        win_pre = jnp.dot(pre_rows, sel_pre, preferred_element_type=jnp.float32)
        win_real = jnp.dot(real_rows, sel_real, preferred_element_type=jnp.float32)

        w = jnp.where(i < patch_num, 1.0, 0.0)   # padded patches contribute 0
        return acc + w * jnp.sum(jnp.abs(win_pre - win_real))

    acc = lax.fori_loop(0, per_core, body, jnp.float32(0.0))
    # Lane-dense (8,128) store of this core's partial sum; wrapper reads [0,0].
    out_ref[...] = jnp.broadcast_to(acc, (1, 8, 128)).astype(jnp.float32)


def _rp_loss_vmem(pre_img, real_img, coords_padded, *, patch_size, patch_num,
                  per_core):
    B, C, H, W = pre_img.shape
    P = patch_size
    BC = B * C
    BCP = _round_up(BC, 8)

    def to_rows(img):
        # (B,C,H,W) -> (H,B*C,W) -> pad channels to BCP -> (H*BCP, W).
        # One cheap wrapper transpose of a *small* image buys contiguous,
        # 8-aligned patch rows in the kernel (no dynamic lane slicing).
        r = jnp.transpose(img, (2, 0, 1, 3)).reshape(H, BC, W)
        if BCP != BC:
            r = jnp.pad(r, ((0, 0), (0, BCP - BC), (0, 0)))  # |0-0| adds 0
        return r.reshape(H * BCP, W)

    pre_rows = to_rows(pre_img)
    real_rows = to_rows(real_img)

    kernel = functools.partial(
        _rploss_vmem_kernel, patch_size=P, patch_num=patch_num,
        per_core=per_core, bcp=BCP, width=W)

    partial_sums = pl.pallas_call(
        kernel,
        out_shape=jax.ShapeDtypeStruct((_NCORES, 8, 128), jnp.float32),
        grid_spec=pltpu.PrefetchScalarGridSpec(
            num_scalar_prefetch=1,
            grid=(_NCORES,),
            in_specs=[
                pl.BlockSpec((H * BCP, W), lambda c, coords: (0, 0)),
                pl.BlockSpec((H * BCP, W), lambda c, coords: (0, 0)),
            ],
            out_specs=pl.BlockSpec((1, 8, 128), lambda c, coords: (c, 0, 0)),
        ),
        compiler_params=pltpu.CompilerParams(
            dimension_semantics=("parallel",),
            vmem_limit_bytes=_VMEM_LIMIT_BYTES,
        ),
    )(coords_padded, pre_rows, real_rows)

    return jnp.sum(partial_sums[:, 0, 0])


# ----------------------------------------------------------------------------
# Gather path: images HBM-resident, deep ring of in-flight patch DMAs.
# ----------------------------------------------------------------------------
def _rploss_gather_kernel(coords_ref, pre_hbm, real_hbm, out_ref,
                          pre_buf, real_buf, sems, *,
                          patch_size, patch_num, per_core, nslots):
    """coords_ref: SMEM (total, 4) int32 [x1, y1, x2, y2] per patch.
    pre_hbm/real_hbm: ANY (BC, H, W).  pre_buf/real_buf: VMEM (nslots, BC, P, P)
    ring buffers; sems: one DMA semaphore per slot shared by the pre+real copies
    (both waits together drain exactly both transfers)."""
    P = patch_size
    core = pl.program_id(0)
    base = core * per_core

    def read_coords(i):
        return (coords_ref[i, 0], coords_ref[i, 1],
                coords_ref[i, 2], coords_ref[i, 3])

    def make_copies(slot, x1, y1, x2, y2):
        # NOTE: keeps the (BC, P, P) window DMA (arbitrary offsets are cheap for
        # the DMA engine); descriptor overhead is hidden by the nslots-deep ring.
        cpp = pltpu.make_async_copy(
            pre_hbm.at[:, pl.ds(x1, P), pl.ds(y1, P)], pre_buf.at[slot],
            sems.at[slot])
        cpr = pltpu.make_async_copy(
            real_hbm.at[:, pl.ds(x2, P), pl.ds(y2, P)], real_buf.at[slot],
            sems.at[slot])
        return cpp, cpr

    # Prime the ring: nslots patch-pair DMAs in flight before any compute, so a
    # wait at step j targets a transfer issued nslots iterations earlier.
    for s in range(nslots):                       # nslots is small and static
        x1, y1, x2, y2 = read_coords(base + s)
        cpp, cpr = make_copies(s, x1, y1, x2, y2)
        cpp.start()
        cpr.start()

    def body(j, acc):
        i = base + j
        slot = lax.rem(j, jnp.int32(nslots))
        # SMEM coordinate reads hoisted above the waits (.wait() breaks
        # sst->sld forwarding).  Prefetch index clamped to stay in bounds.
        x1, y1, x2, y2 = read_coords(i)
        nxt = jnp.minimum(i + nslots, base + per_core - 1)
        nx1, ny1, nx2, ny2 = read_coords(nxt)

        cpp, cpr = make_copies(slot, x1, y1, x2, y2)
        cpp.wait()
        cpr.wait()

        diff = (pre_buf[slot].astype(jnp.float32)
                - real_buf[slot].astype(jnp.float32))
        w = jnp.where(i < patch_num, 1.0, 0.0)    # padded patches contribute 0
        acc = acc + w * jnp.sum(jnp.abs(diff))    # scalar carried state only

        @pl.when(j + nslots < per_core)
        def _():
            ncpp, ncpr = make_copies(slot, nx1, ny1, nx2, ny2)
            ncpp.start()
            ncpr.start()

        return acc

    acc = lax.fori_loop(0, per_core, body, jnp.float32(0.0))
    out_ref[...] = jnp.broadcast_to(acc, (1, 8, 128)).astype(jnp.float32)


def _rp_loss_gather(pre_img, real_img, coords_padded, *, patch_size, patch_num,
                    per_core):
    B, C, H, W = pre_img.shape
    P = patch_size
    BC = B * C
    itemsize = jnp.dtype(pre_img.dtype).itemsize

    # Ring depth: as many patch-pair slots as the staging budget allows,
    # accounting for the lane padding of the (P, P) tiles in VMEM.
    slot_bytes = 2 * BC * _round_up(P, 8) * _round_up(P, 128) * itemsize
    nslots = max(2, min(_GATHER_STAGING_BYTES // slot_bytes, 16))
    nslots = int(max(1, min(nslots, per_core)))

    # Free reshape (no transpose, no full-image HBM pass): NCHW -> (B*C, H, W).
    pre = pre_img.reshape(BC, H, W)
    real = real_img.reshape(BC, H, W)

    kernel = functools.partial(
        _rploss_gather_kernel, patch_size=P, patch_num=patch_num,
        per_core=per_core, nslots=nslots)

    partial_sums = pl.pallas_call(
        kernel,
        out_shape=jax.ShapeDtypeStruct((_NCORES, 8, 128), jnp.float32),
        grid_spec=pltpu.PrefetchScalarGridSpec(
            num_scalar_prefetch=1,
            grid=(_NCORES,),
            in_specs=[
                pl.BlockSpec(memory_space=pl.ANY),   # pre  stays in HBM
                pl.BlockSpec(memory_space=pl.ANY),   # real stays in HBM
            ],
            out_specs=pl.BlockSpec((1, 8, 128), lambda c, coords: (c, 0, 0)),
            scratch_shapes=[
                pltpu.VMEM((nslots, BC, P, P), pre.dtype),
                pltpu.VMEM((nslots, BC, P, P), real.dtype),
                pltpu.SemaphoreType.DMA((nslots,)),
            ],
        ),
        compiler_params=pltpu.CompilerParams(
            dimension_semantics=("parallel",),
            vmem_limit_bytes=_VMEM_LIMIT_BYTES,
        ),
    )(coords_padded, pre, real)

    return jnp.sum(partial_sums[:, 0, 0])


# ----------------------------------------------------------------------------
# Public wrapper (mirrors RPLoss.forward) and pure-JAX reference.
# ----------------------------------------------------------------------------
def _sample_coords(key, H, W, P, patch_num):
    # get_patch() draws x,y independently per call; torch.randint's exclusive
    # high is (dim - P), matching jax.random.randint below -> x in [0, dim-P-1].
    k1, k2, k3, k4 = jax.random.split(key, 4)
    x1 = jax.random.randint(k1, (patch_num,), 0, H - P, dtype=jnp.int32)
    y1 = jax.random.randint(k2, (patch_num,), 0, W - P, dtype=jnp.int32)
    x2 = jax.random.randint(k3, (patch_num,), 0, H - P, dtype=jnp.int32)
    y2 = jax.random.randint(k4, (patch_num,), 0, W - P, dtype=jnp.int32)
    coords = jnp.stack([x1, y1, x2, y2], axis=1)          # (patch_num, 4)

    per_core = _cdiv(patch_num, _NCORES)
    total = _NCORES * per_core
    if total != patch_num:                                # pad; padded rows weigh 0
        coords_padded = jnp.zeros((total, 4), jnp.int32).at[:patch_num].set(coords)
    else:
        coords_padded = coords
    return coords, coords_padded, per_core


def rp_loss(pre_img, real_img, key, *, patch_size=8, patch_num=16, norm=False,
            path=None):
    """Pallas implementation of RPLoss.forward.  Returns (loss, coords)."""
    assert pre_img.shape == real_img.shape
    B, C, H, W = pre_img.shape
    P = patch_size
    assert H > P and W > P, "patch_size must be smaller than the spatial dims"

    coords, coords_padded, per_core = _sample_coords(key, H, W, P, patch_num)

    if path is None:
        BCP = _round_up(B * C, 8)
        itemsize = jnp.dtype(pre_img.dtype).itemsize
        # 2 images x double buffering, lane-padded footprint.
        staged = 2 * 2 * H * BCP * _round_up(W, 128) * itemsize
        path = "vmem" if staged <= _FAST_PATH_VMEM_BYTES else "gather"

    if path == "vmem":
        total = _rp_loss_vmem(pre_img, real_img, coords_padded,
                              patch_size=P, patch_num=patch_num,
                              per_core=per_core)
    elif path == "gather":
        total = _rp_loss_gather(pre_img, real_img, coords_padded,
                                patch_size=P, patch_num=patch_num,
                                per_core=per_core)
    else:
        raise ValueError(f"unknown path: {path!r}")

    loss = total * (1.0 / float(patch_num * P * P * B * C))
    if norm:
        # PyTorch normalizes BOTH patches with real_img's min/max:
        # L1(2(a-lb)/(ub-lb)-1, 2(b-lb)/(ub-lb)-1) == 2/(ub-lb) * L1(a, b),
        # so a post-hoc rescale of the un-normalized loss is exact.
        # (Same ub == lb hazard as the original module.)
        lb = jnp.min(real_img)
        ub = jnp.max(real_img)
        loss = loss * (2.0 / (ub - lb))
    return loss, coords


def _rp_loss_reference(pre_img, real_img, coords, *, patch_size, norm=False):
    """Pure-JAX reference mirroring the PyTorch loop."""
    P = patch_size
    patch_num = coords.shape[0]
    total = jnp.float32(0.0)
    for i in range(patch_num):
        x1, y1, x2, y2 = (int(coords[i, 0]), int(coords[i, 1]),
                          int(coords[i, 2]), int(coords[i, 3]))
        pp = pre_img[:, :, x1:x1 + P, y1:y1 + P]
        rp = real_img[:, :, x2:x2 + P, y2:y2 + P]
        if norm:
            lb, ub = jnp.min(real_img), jnp.max(real_img)
            pp = 2 * (pp - lb) / (ub - lb) - 1
            rp = 2 * (rp - lb) / (ub - lb) - 1
        total = total + jnp.mean(jnp.abs(pp - rp))
    return total / patch_num


if __name__ == "__main__":
    key = jax.random.PRNGKey(0)
    k_pre, k_real, k_patch = jax.random.split(key, 3)

    B, C, H, W = 2, 4, 16, 16
    patch_size, patch_num = 8, 16

    pre_img = jax.random.normal(k_pre, (B, C, H, W), dtype=jnp.float32)
    real_img = jax.random.normal(k_real, (B, C, H, W), dtype=jnp.float32)

    # Auto path: images are tiny, so the size gate picks the VMEM fast path.
    loss, coords = rp_loss(pre_img, real_img, k_patch,
                           patch_size=patch_size, patch_num=patch_num)
    loss = jax.block_until_ready(loss)
    ref = _rp_loss_reference(pre_img, real_img, jax.device_get(coords),
                             patch_size=patch_size)
    assert jnp.allclose(loss, ref, rtol=1e-5, atol=1e-6), (loss, ref)

    # Large-image HBM-gather path, forced on the same inputs as a check
    # (same key -> same coords -> same reference value).
    loss_g, _ = rp_loss(pre_img, real_img, k_patch,
                        patch_size=patch_size, patch_num=patch_num,
                        path="gather")
    loss_g = jax.block_until_ready(loss_g)
    assert jnp.allclose(loss_g, ref, rtol=1e-5, atol=1e-6), (loss_g, ref)

    print("KERNEL_OK")
</pallas_src>

<mosaic_0001>
module attributes {stable_mosaic.version = 11 : i64} {
  func.func @_rploss_vmem_kernel(%arg0: i32, %arg1: memref<16x4xi32, #tpu.memory_space<smem>>, %arg2: memref<128x16xf32, #tpu.memory_space<vmem>>, %arg3: memref<128x16xf32, #tpu.memory_space<vmem>>, %arg4: memref<1x8x128xf32, #tpu.memory_space<vmem>>) attributes {dimension_semantics = [#tpu.dimension_semantics<parallel>], iteration_bounds = array<i64: 2>, scalar_prefetch = 1 : i64, scratch_operands = 0 : i64, tpu.core_type = #tpu.core_type<tc>, window_params = [{pipeline_mode = #tpu.pipeline_mode<synchronous>, transform_indices = @transform_0, window_bounds = array<i64: 128, 16>}, {pipeline_mode = #tpu.pipeline_mode<synchronous>, transform_indices = @transform_1, window_bounds = array<i64: 128, 16>}, {transform_indices = @transform_2, window_bounds = array<i64: 1, 8, 128>}]} {
    %c8_i32 = arith.constant 8 : i32
    %0 = arith.muli %arg0, %c8_i32 : i32
    %1 = tpu.iota {dimensions = array<i32: 0>} : vector<16x8xi32>
    %2 = tpu.iota {dimensions = array<i32: 1>} : vector<16x8xi32>
    %cst = arith.constant 0.000000e+00 : f32
    %c0_i32 = arith.constant 0 : i32
    %c8_i32_0 = arith.constant 8 : i32
    %3 = arith.addi %c0_i32, %c8_i32_0 : i32
    %c1_i32 = arith.constant 1 : i32
    %4 = scf.for %arg5 = %c0_i32 to %3 step %c1_i32 iter_args(%arg6 = %cst) -> (f32)  : i32 {
      %7 = arith.addi %0, %arg5 : i32
      %8 = arith.index_cast %7 : i32 to index
      %c0_4 = arith.constant 0 : index
      %9 = memref.load %arg1[%8, %c0_4] : memref<16x4xi32, #tpu.memory_space<smem>>
      %10 = arith.index_cast %7 : i32 to index
      %c1 = arith.constant 1 : index
      %11 = memref.load %arg1[%10, %c1] : memref<16x4xi32, #tpu.memory_space<smem>>
      %12 = arith.index_cast %7 : i32 to index
      %c2 = arith.constant 2 : index
      %13 = memref.load %arg1[%12, %c2] : memref<16x4xi32, #tpu.memory_space<smem>>
      %14 = arith.index_cast %7 : i32 to index
      %c3 = arith.constant 3 : index
      %15 = memref.load %arg1[%14, %c3] : memref<16x4xi32, #tpu.memory_space<smem>>
      %c8_i32_5 = arith.constant 8 : i32
      %16 = arith.muli %9, %c8_i32_5 : i32
      %17 = tpu.assume_multiple %16, 8 : i32
      %c8_i32_6 = arith.constant 8 : i32
      %18 = arith.muli %13, %c8_i32_6 : i32
      %19 = tpu.assume_multiple %18, 8 : i32
      %20 = arith.index_cast %17 : i32 to index
      %c0_7 = arith.constant 0 : index
      %21 = vector.load %arg2[%20, %c0_7] : memref<128x16xf32, #tpu.memory_space<vmem>>, vector<64x16xf32>
      %22 = arith.index_cast %19 : i32 to index
      %c0_8 = arith.constant 0 : index
      %23 = vector.load %arg3[%22, %c0_8] : memref<128x16xf32, #tpu.memory_space<vmem>>, vector<64x16xf32>
      %24 = vector.broadcast %11 : i32 to vector<16x8xi32>
      %25 = arith.addi %2, %24 : vector<16x8xi32>
      %26 = arith.cmpi eq, %1, %25 : vector<16x8xi32>
      %27 = arith.extui %26 : vector<16x8xi1> to vector<16x8xi32>
      %28 = arith.sitofp %27 : vector<16x8xi32> to vector<16x8xf32>
      %29 = vector.broadcast %15 : i32 to vector<16x8xi32>
      %30 = arith.addi %2, %29 : vector<16x8xi32>
      %31 = arith.cmpi eq, %1, %30 : vector<16x8xi32>
      %32 = arith.extui %31 : vector<16x8xi1> to vector<16x8xi32>
      %33 = arith.sitofp %32 : vector<16x8xi32> to vector<16x8xf32>
      %cst_9 = arith.constant dense<0.000000e+00> : vector<64x8xf32>
      %34 = tpu.matmul %21, %28, %cst_9 {dimension_numbers = #tpu.dot_dimension_numbers<[1], [0], [0], [1], [0, 0, 1, 1], [], []>} : vector<64x16xf32>, vector<16x8xf32>, vector<64x8xf32> -> vector<64x8xf32>
      %cst_10 = arith.constant dense<0.000000e+00> : vector<64x8xf32>
      %35 = tpu.matmul %23, %33, %cst_10 {dimension_numbers = #tpu.dot_dimension_numbers<[1], [0], [0], [1], [0, 0, 1, 1], [], []>} : vector<64x16xf32>, vector<16x8xf32>, vector<64x8xf32> -> vector<64x8xf32>
      %c16_i32 = arith.constant 16 : i32
      %36 = arith.cmpi slt, %7, %c16_i32 : i32
      %cst_11 = arith.constant 1.000000e+00 : f32
      %cst_12 = arith.constant 0.000000e+00 : f32
      %37 = arith.select %36, %cst_11, %cst_12 : f32
      %38 = arith.subf %34, %35 : vector<64x8xf32>
      %39 = math.absf %38 : vector<64x8xf32>
      %40 = vector.shape_cast %39 : vector<64x8xf32> to vector<1x64x8xf32>
      %cst_13 = arith.constant dense<0.000000e+00> : vector<1xf32>
      %41 = vector.multi_reduction <add>, %40, %cst_13 [1, 2] : vector<1x64x8xf32> to vector<1xf32>
      %42 = vector.shape_cast %41 : vector<1xf32> to vector<1x1x1xf32>
      %43 = vector.extract %42[0, 0, 0] : f32 from vector<1x1x1xf32>
      %44 = arith.mulf %37, %43 : f32
      %45 = arith.addf %arg6, %44 : f32
      scf.yield %45 : f32
    }
    %c8_i32_1 = arith.constant 8 : i32
    %5 = vector.broadcast %4 : f32 to vector<1x8x128xf32>
    %c0 = arith.constant 0 : index
    %c0_2 = arith.constant 0 : index
    %c0_3 = arith.constant 0 : index
    %6 = vector.load %arg4[%c0, %c0_2, %c0_3] : memref<1x8x128xf32, #tpu.memory_space<vmem>>, vector<1x8x128xf32>
    tpu.vector_store %arg4[%c0, %c0_2, %c0_3], %5 {strides = array<i32>} : memref<1x8x128xf32, #tpu.memory_space<vmem>>, vector<1x8x128xf32>,
    return
  }
  func.func @transform_0(%arg0: i32, %arg1: memref<16x4xi32, #tpu.memory_space<smem>>) -> (i32, i32) {
    %c0_i32 = arith.constant 0 : i32
    %c0_i32_0 = arith.constant 0 : i32
    %c0_i32_1 = arith.constant 0 : i32
    return %c0_i32, %c0_i32_0 : i32, i32
  }
  func.func @transform_1(%arg0: i32, %arg1: memref<16x4xi32, #tpu.memory_space<smem>>) -> (i32, i32) {
    %c0_i32 = arith.constant 0 : i32
    %c0_i32_0 = arith.constant 0 : i32
    %c0_i32_1 = arith.constant 0 : i32
    return %c0_i32, %c0_i32_0 : i32, i32
  }
  func.func @transform_2(%arg0: i32, %arg1: memref<16x4xi32, #tpu.memory_space<smem>>) -> (i32, i32, i32) {
    %c0_i32 = arith.constant 0 : i32
    %c0_i32_0 = arith.constant 0 : i32
    %c0_i32_1 = arith.constant 0 : i32
    return %arg0, %c0_i32, %c0_i32_0 : i32, i32, i32
  }
}

</mosaic_0001>

<llo_original>
// kernel: tpu_custom_call.1
$region0: #{tpu_custom_call.1}
  #allocation0 [shape = 'u32[]', space=smem, size = 0x4, offset = 0x4, fixed_abs, tag = 'smem constant byte address 0x4 - core index']
  #allocation1 [shape = 'u32[144,128]{1,0:T(1,128)}', space=vmem, size = 0x12000, scoped, tag = 'internal scratch']
  #allocation2 [shape = 's32[1]{0}', space=sflag, size = 0x4, scoped, tag = 'scoped memory for tpu_custom_call.1']
  #allocation3 [shape = 'u8[8192]{0}', space=smem, size = 0x2000, scoped, tag = 'prefetched SMEM operand 0']
  %s0 = inlined_call_operand.vmem [shape: s32[16,4], index: 0, kind: input, shape index: {}]
  %s1 = inlined_call_operand.vmem [shape: f32[128,16], index: 1, kind: input, shape index: {}]
  %s2 = inlined_call_operand.vmem [shape: f32[128,16], index: 2, kind: input, shape index: {}]
  %s3 = inlined_call_operand.hbm [shape: f32[2,8,128], index: 3, kind: output, shape index: {}]
  %s4 = sld [smem:[#allocation0]]
  $region48: #{tpu_custom_call.1} parent=0
    _
  %s6 = ssub.s32 1, %s4
  %s7 = scalar_select 0, %s6, %s4
  %s8 = sshll.u32 %s0, 4
  %s9 = int_to_ptr.vmem [resolvable:$true] %s8
  %11 = dma.vmem_to_smem %s9, 256, [#allocation3], [#allocation2]
  %12 = dma.done [#allocation2], 256
  %13 = sfence
  $region1: #{tpu_custom_call.1} parent=0
    #allocation4 [shape = 'u8[8192]{0}', space=vmem, size = 0x2000, scoped, tag = 'output window, operand 0']
    #allocation5 [shape = 's32[2]{0}', space=sflag, size = 0x8, scoped, tag = 'scoped memory for tpu_custom_call.1']
    %14 = vsyncpa [#allocation5], 0
    %s15 = scalar_lea.sflag [#allocation5], 1
    %16 = vsyncpa %s15, 0
    loop: start=0, step=1, limit=4
    $region2: #{tpu_custom_call.1} parent=1 // loop_pre_header
      _
    $region3: #{tpu_custom_call.1} parent=1 // loop_header
      %s18 = sphi 0, %s22
      %p19 = scmp.ge.s32.totalorder %s18, 4
      %s26 = sphi 0, %s26
      %s28 = sphi 0, %s26
      %s29 = sphi 0, %s28
      %s43 = sphi 0, %s29
      %s47 = sphi 0, %s47
      %s49 = sphi 0, %s47
      %s50 = sphi 0, %s49
      %s64 = sphi 0, %s50
      %s70 = sphi 0, %s72
      %s73 = sphi 0, %s70
      %s74 = sphi 0, %s73
      %s90 = sphi 0, %s74
    $region4: #{tpu_custom_call.1} parent=1 // loop_header_branch
      %21 = sbr.rel (%p19) target = $region8
    $region5: #{tpu_custom_call.1} parent=1 // loop_body
      %s23 = ssub.s32 %s18, 1
      %s24 = ssub.s32 %s18, 2
      %s25 = sadd.s32 %s18, 1
      %s27 = sadd.s32 %s26, 1
      %p30 = scmp.eq.s32.totalorder %s18, 1
      %p31 = scmp.ne.s32.totalorder %s26, %s28
      %p32 = scmp.eq.s32.totalorder %s18, 0
      %p33 = por %p31, %p32
      %p34 = scmp.ne.s32.totalorder %s26, %s28
      %p35 = scmp.eq.s32.totalorder %s23, 1
      %p36 = por %p34, %p35
      %p37 = scmp.ne.s32.totalorder %s28, %s29
      %p38 = scmp.eq.s32.totalorder %s23, 0
      %p39 = por %p37, %p38
      %p40 = scmp.ne.s32.totalorder %s28, %s29
      %p41 = scmp.eq.s32.totalorder %s24, 1
      %p42 = por %p40, %p41
      %p44 = scmp.ne.s32.totalorder %s29, %s43
      %p45 = scmp.eq.s32.totalorder %s24, 0
      %p46 = por %p44, %p45
      %s48 = sadd.s32 %s47, 1
      %p51 = scmp.eq.s32.totalorder %s18, 1
      %p52 = scmp.ne.s32.totalorder %s47, %s49
      %p53 = scmp.eq.s32.totalorder %s18, 0
      %p54 = por %p52, %p53
      %p55 = scmp.ne.s32.totalorder %s47, %s49
      %p56 = scmp.eq.s32.totalorder %s23, 1
      %p57 = por %p55, %p56
      %p58 = scmp.ne.s32.totalorder %s49, %s50
      %p59 = scmp.eq.s32.totalorder %s23, 0
      %p60 = por %p58, %p59
      %p61 = scmp.ne.s32.totalorder %s49, %s50
      %p62 = scmp.eq.s32.totalorder %s24, 1
      %p63 = por %p61, %p62
      %p65 = scmp.ne.s32.totalorder %s50, %s64
      %p66 = scmp.eq.s32.totalorder %s24, 0
      %p67 = por %p65, %p66
      %s68 = ssub.s32 %s18, %s25
      %p69 = scmp.eq.s32.totalorder %s68, 0
      %s71 = sadd.s32 %s70, 1
      %s72 = scalar_select %p69, %s70, %s71
      %p75 = pneg %p69
      %p76 = scmp.eq.s32.totalorder %s18, 1
      %p77 = por %p75, %p76
      %p78 = scmp.ne.s32.totalorder %s70, %s73
      %p79 = scmp.eq.s32.totalorder %s18, 0
      %p80 = por %p78, %p79
      %p81 = scmp.ne.s32.totalorder %s70, %s73
      %p82 = scmp.eq.s32.totalorder %s23, 1
      %p83 = por %p81, %p82
      %p84 = scmp.ne.s32.totalorder %s73, %s74
      %p85 = scmp.eq.s32.totalorder %s23, 0
      %p86 = por %p84, %p85
      %p87 = scmp.ne.s32.totalorder %s73, %s74
      %p88 = scmp.eq.s32.totalorder %s24, 1
      %p89 = por %p87, %p88
      %p91 = scmp.ne.s32.totalorder %s74, %s90
      %p92 = scmp.eq.s32.totalorder %s24, 0
      %p93 = por %p91, %p92
      %p94 = scmp.le.s32.totalorder 1, %s18
      %p95 = scmp.lt.s32.totalorder %s18, 3
      %p96 = pnand %p94, %p95
      %p97 = pneg %p96
      // Predicated region
      $region9: #{tpu_custom_call.1} parent=5 // pred_check
        _
      $region10: #{tpu_custom_call.1} parent=5 // pred_check_branch
        %99 = sbr.rel (%p96) target = $region12
      $region11: #{tpu_custom_call.1} parent=5 // pred_region
        %s100 = ssub.s32 %s18, 1
        // Predicated region
        $region13: #{tpu_custom_call.1} parent=11 // pred_check
          %p101 = pneg %p39
        $region14: #{tpu_custom_call.1} parent=11 // pred_check_branch
          %103 = sbr.rel (%p101) target = $region16
        $region15: #{tpu_custom_call.1} parent=11 // pred_region
          _
        $region16: #{tpu_custom_call.1} parent=11 // pred_fallthru
          _
        // Predicated region
        $region17: #{tpu_custom_call.1} parent=11 // pred_check
          %p104 = pneg %p60
        $region18: #{tpu_custom_call.1} parent=11 // pred_check_branch
          %106 = sbr.rel (%p104) target = $region20
        $region19: #{tpu_custom_call.1} parent=11 // pred_region
          _
        $region20: #{tpu_custom_call.1} parent=11 // pred_fallthru
          _
      $region12: #{tpu_custom_call.1} parent=5 // pred_fallthru
        _
      %p107 = scmp.lt.s32.totalorder %s18, 2
      // Predicated region
      $region21: #{tpu_custom_call.1} parent=5 // pred_check
        %p108 = pneg %p107
      $region22: #{tpu_custom_call.1} parent=5 // pred_check_branch
        %110 = sbr.rel (%p108) target = $region24
      $region23: #{tpu_custom_call.1} parent=5 // pred_region
        _
      $region24: #{tpu_custom_call.1} parent=5 // pred_fallthru
        _
      %p111 = scmp.le.s32.totalorder 1, %s18
      %p112 = scmp.lt.s32.totalorder %s18, 3
      %p113 = pnand %p111, %p112
      %p114 = pneg %p113
      // Predicated region
      $region25: #{tpu_custom_call.1} parent=5 // pred_check
        _
      $region26: #{tpu_custom_call.1} parent=5 // pred_check_branch
        %116 = sbr.rel (%p113) target = $region28
      $region27: #{tpu_custom_call.1} parent=5 // pred_region
        %s117 = ssub.s32 %s18, 1
        %p118 = pneg %p39
        %p119 = pneg %p36
        %p120 = pneg %p60
        %p121 = pneg %p57
        %p122 = pneg %p86
        %p123 = pneg %p83
        %s124 = sand.u32 %s73, 1
        %s125 = scalar_lea.sflag [#allocation5], %s124
        %s126 = sand.u32 %s73, 1
        %s127 = smul.addr %s126, 8
        %s128 = scalar_lea.vmem [#allocation4], %s127
        %s129 = smul.u32 %s23, 8
        %v130 = vlaneseq
        %v131 = vshrl.u32 %v130, 7
        %v132 = vadd.s32 %v131, 8
        %v133 = vlaneseq
        %v134 = vand.u32 %v133, 127
        loop: start=0, step=1, limit=8
        $region29: #{tpu_custom_call.1} parent=27 // loop_pre_header
          _
        $region30: #{tpu_custom_call.1} parent=27 // loop_header
          %s136 = sphi 0, %s140
          %p137 = scmp.ge.s32.totalorder %s136, 8
          %s141 = sphi 0.0, %s490
        $region31: #{tpu_custom_call.1} parent=27 // loop_header_branch
          %139 = sbr.rel (%p137) target = $region35
        $region32: #{tpu_custom_call.1} parent=27 // loop_body
          %s142 = sadd.s32 %s129, %s136
          %s143 = smul.u32 %s142, 128
          %s144 = sld [smem:[#allocation3 + %s143]]
          %s145 = sadd.s32 %s143, 1
          %s146 = sld [smem:[#allocation3 + %s145]]
          %s147 = sadd.s32 %s143, 2
          %s148 = sld [smem:[#allocation3 + %s147]]
          %s149 = sadd.s32 %s143, 3
          %s150 = sld [smem:[#allocation3 + %s149]]
          %s151 = smul.u32 %s144, 8
          %s152 = smul.u32 %s148, 8
          %s153 = scalar_lea.vmem %s1, %s151
          %v154 = vld [vmem:[%s153] sm:$0xff]
          %v155 = vld [vmem:[%s153 + $0x8] sm:$0xff]
          %v156 = vld [vmem:[%s153 + $0x10] sm:$0xff]
          %v157 = vld [vmem:[%s153 + $0x18] sm:$0xff]
          %v158 = vld [vmem:[%s153 + $0x20] sm:$0xff]
          %v159 = vld [vmem:[%s153 + $0x28] sm:$0xff]
          %v160 = vld [vmem:[%s153 + $0x30] sm:$0xff]
          %v161 = vld [vmem:[%s153 + $0x38] sm:$0xff]
          %s162 = scalar_lea.vmem %s2, %s152
          %v163 = vld [vmem:[%s162] sm:$0xff]
          %v164 = vld [vmem:[%s162 + $0x8] sm:$0xff]
          %v165 = vld [vmem:[%s162 + $0x10] sm:$0xff]
          %v166 = vld [vmem:[%s162 + $0x18] sm:$0xff]
          %v167 = vld [vmem:[%s162 + $0x20] sm:$0xff]
          %v168 = vld [vmem:[%s162 + $0x28] sm:$0xff]
          %v169 = vld [vmem:[%s162 + $0x30] sm:$0xff]
          %v170 = vld [vmem:[%s162 + $0x38] sm:$0xff]
          %v171 = vstv %s146
          %v172 = vadd.s32 %v134, %v171
          %vm173 = vcmp.eq.s32.totalorder %v131, %v172
          %vm174 = vcmp.eq.s32.totalorder %v132, %v172
          %v175 = vsel %vm173, 1, 0
          %v176 = vsel %vm174, 1, 0
          %v177 = vcvt.s32.f32 %v175
          %v178 = vcvt.s32.f32 %v176
          %v179 = vstv %s150
          %v180 = vadd.s32 %v134, %v179
          %vm181 = vcmp.eq.s32.totalorder %v131, %v180
          %vm182 = vcmp.eq.s32.totalorder %v132, %v180
          %v183 = vsel %vm181, 1, 0
          %v184 = vsel %vm182, 1, 0
          %v185 = vcvt.s32.f32 %v183
          %v186 = vcvt.s32.f32 %v184
          %vm187 = vcmask 130048
          %v189 = vsel %vm187, %v154, 0
          %v192 = vsel %vm187, %v155, 0
          %v195 = vsel %vm187, %v156, 0
          %v198 = vsel %vm187, %v157, 0
          %v201 = vsel %vm187, %v158, 0
          %v204 = vsel %vm187, %v159, 0
          %v207 = vsel %vm187, %v160, 0
          %v210 = vsel %vm187, %v161, 0
          %212 = vmatprep.subr.mxu0 0.0
          %213 = vmatpush1.msra.mxu0 %v177
          %214 = vmatprep.subr.mxu0 0.0
          %215 = vmatpush1.msra.mxu0 %v178
          %216 = vmatprep.subr.mxu0 0.0
          %217 = vmatpush1.msra.mxu0 0.0
          %218 = vmatprep.subr.mxu0 0.0
          %219 = vmatpush1.msra.mxu0 0.0
          %220 = vmatprep.subr.mxu0 0.0
          %221 = vmatpush1.msra.mxu0 0.0
          %222 = vmatprep.subr.mxu0 0.0
          %223 = vmatpush1.msra.mxu0 0.0
          %224 = vmatprep.subr.mxu0 0.0
          %225 = vmatpush1.msra.mxu0 0.0
          %226 = vmatprep.subr.mxu0 0.0
          %227 = vmatpush1.msra.mxu0 0.0
          %228 = vmatprep.subr.mxu0 0.0
          %229 = vmatpush1.msra.mxu0 0.0
          %230 = vmatprep.subr.mxu0 0.0
          %231 = vmatpush1.msra.mxu0 0.0
          %232 = vmatprep.subr.mxu0 0.0
          %233 = vmatpush1.msra.mxu0 0.0
          %234 = vmatprep.subr.mxu0 0.0
          %235 = vmatpush1.msra.mxu0 0.0
          %236 = vmatprep.subr.mxu0 0.0
          %237 = vmatpush1.msra.mxu0 0.0
          %238 = vmatprep.subr.mxu0 0.0
          %239 = vmatpush1.msra.mxu0 0.0
          %240 = vmatprep.subr.mxu0 0.0
          %241 = vmatpush1.msra.mxu0 0.0
          %242 = vmatprep.subr.mxu0 0.0
          %243 = vmatpush1.msra.mxu0 0.0
          %244 = vmatprep.subr.mxu0 0.0
          %245 = vmatpush1.msra.mxu0 0.0
          %246 = vmatprep.subr.mxu0 0.0
          %247 = vmatpush1.msra.mxu0 0.0
          %248 = vmatprep.subr.mxu0 0.0
          %249 = vmatpush1.msra.mxu0 0.0
          %250 = vmatprep.subr.mxu0 0.0
          %251 = vmatpush1.msra.mxu0 0.0
          %252 = vmatprep.subr.mxu0 0.0
          %253 = vmatpush1.msra.mxu0 0.0
          %254 = vmatprep.subr.mxu0 0.0
          %255 = vmatpush1.msra.mxu0 0.0
          %256 = vmatprep.subr.mxu0 0.0
          %257 = vmatpush1.msra.mxu0 0.0
          %258 = vmatprep.subr.mxu0 0.0
          %259 = vmatpush1.msra.mxu0 0.0
          %260 = vmatprep.subr.mxu0 0.0
          %261 = vmatpush1.msra.mxu0 0.0
          %262 = vmatprep.subr.mxu0 0.0
          %263 = vmatpush1.msra.mxu0 0.0
          %264 = vmatprep.subr.mxu0 0.0
          %265 = vmatpush1.msra.mxu0 0.0
          %266 = vmatprep.subr.mxu0 0.0
          %267 = vmatpush1.msra.mxu0 0.0
          %268 = vmatprep.subr.mxu0 0.0
          %269 = vmatpush1.msra.mxu0 0.0
          %270 = vmatprep.subr.mxu0 0.0
          %271 = vmatpush1.msra.mxu0 0.0
          %272 = vmatprep.subr.mxu0 0.0
          %273 = vmatpush1.msra.mxu0 0.0
          %274 = vmatprep.subr.mxu0 0.0
          %275 = vmatpush1.msra.mxu0 0.0
          %276 = vmatprep.mubr.f32.mxu0 0.0
          %277 = vmatmul.mubr.f32.gmra.mrb[0].mxu0 %v189
          %v278 = vpop.f32.mrb[0].mxu0
          %v279 = vadd.f32 0.0, %v278
          %v280 = vpop.f32.mrb[0].mxu0
          %281 = vmatprep.mubr.f32.mxu0 0.0
          %282 = vmatmul.mubr.f32.gmra.mrb[0].mxu0 %v192
          %v283 = vpop.f32.mrb[0].mxu0
          %v284 = vadd.f32 0.0, %v283
          %v285 = vpop.f32.mrb[0].mxu0
          %286 = vmatprep.mubr.f32.mxu0 0.0
          %287 = vmatmul.mubr.f32.gmra.mrb[0].mxu0 %v195
          %v288 = vpop.f32.mrb[0].mxu0
          %v289 = vadd.f32 0.0, %v288
          %v290 = vpop.f32.mrb[0].mxu0
          %291 = vmatprep.mubr.f32.mxu0 0.0
          %292 = vmatmul.mubr.f32.gmra.mrb[0].mxu0 %v198
          %v293 = vpop.f32.mrb[0].mxu0
          %v294 = vadd.f32 0.0, %v293
          %v295 = vpop.f32.mrb[0].mxu0
          %296 = vmatprep.mubr.f32.mxu0 0.0
          %297 = vmatmul.mubr.f32.gmra.mrb[0].mxu0 %v201
          %v298 = vpop.f32.mrb[0].mxu0
          %v299 = vadd.f32 0.0, %v298
          %v300 = vpop.f32.mrb[0].mxu0
          %301 = vmatprep.mubr.f32.mxu0 0.0
          %302 = vmatmul.mubr.f32.gmra.mrb[0].mxu0 %v204
          %v303 = vpop.f32.mrb[0].mxu0
          %v304 = vadd.f32 0.0, %v303
          %v305 = vpop.f32.mrb[0].mxu0
          %306 = vmatprep.mubr.f32.mxu0 0.0
          %307 = vmatmul.mubr.f32.gmra.mrb[0].mxu0 %v207
          %v308 = vpop.f32.mrb[0].mxu0
          %v309 = vadd.f32 0.0, %v308
          %v310 = vpop.f32.mrb[0].mxu0
          %311 = vmatprep.mubr.f32.mxu0 0.0
          %312 = vmatmul.mubr.f32.gmra.mrb[0].mxu0 %v210
          %v313 = vpop.f32.mrb[0].mxu0
          %v314 = vadd.f32 0.0, %v313
          %v315 = vpop.f32.mrb[0].mxu0
          %316 = vdwg.mxu0
          %v318 = vsel %vm187, %v163, 0
          %v321 = vsel %vm187, %v164, 0
          %v324 = vsel %vm187, %v165, 0
          %v327 = vsel %vm187, %v166, 0
          %v330 = vsel %vm187, %v167, 0
          %v333 = vsel %vm187, %v168, 0
          %v336 = vsel %vm187, %v169, 0
          %v339 = vsel %vm187, %v170, 0
          %341 = vmatprep.subr.mxu0 0.0
          %342 = vmatpush1.msra.mxu0 %v185
          %343 = vmatprep.subr.mxu0 0.0
          %344 = vmatpush1.msra.mxu0 %v186
          %345 = vmatprep.subr.mxu0 0.0
          %346 = vmatpush1.msra.mxu0 0.0
          %347 = vmatprep.subr.mxu0 0.0
          %348 = vmatpush1.msra.mxu0 0.0
          %349 = vmatprep.subr.mxu0 0.0
          %350 = vmatpush1.msra.mxu0 0.0
          %351 = vmatprep.subr.mxu0 0.0
          %352 = vmatpush1.msra.mxu0 0.0
          %353 = vmatprep.subr.mxu0 0.0
          %354 = vmatpush1.msra.mxu0 0.0
          %355 = vmatprep.subr.mxu0 0.0
          %356 = vmatpush1.msra.mxu0 0.0
          %357 = vmatprep.subr.mxu0 0.0
          %358 = vmatpush1.msra.mxu0 0.0
          %359 = vmatprep.subr.mxu0 0.0
          %360 = vmatpush1.msra.mxu0 0.0
          %361 = vmatprep.subr.mxu0 0.0
          %362 = vmatpush1.msra.mxu0 0.0
          %363 = vmatprep.subr.mxu0 0.0
          %364 = vmatpush1.msra.mxu0 0.0
          %365 = vmatprep.subr.mxu0 0.0
          %366 = vmatpush1.msra.mxu0 0.0
          %367 = vmatprep.subr.mxu0 0.0
          %368 = vmatpush1.msra.mxu0 0.0
          %369 = vmatprep.subr.mxu0 0.0
          %370 = vmatpush1.msra.mxu0 0.0
          %371 = vmatprep.subr.mxu0 0.0
          %372 = vmatpush1.msra.mxu0 0.0
          %373 = vmatprep.subr.mxu0 0.0
          %374 = vmatpush1.msra.mxu0 0.0
          %375 = vmatprep.subr.mxu0 0.0
          %376 = vmatpush1.msra.mxu0 0.0
          %377 = vmatprep.subr.mxu0 0.0
          %378 = vmatpush1.msra.mxu0 0.0
          %379 = vmatprep.subr.mxu0 0.0
          %380 = vmatpush1.msra.mxu0 0.0
          %381 = vmatprep.subr.mxu0 0.0
          %382 = vmatpush1.msra.mxu0 0.0
          %383 = vmatprep.subr.mxu0 0.0
          %384 = vmatpush1.msra.mxu0 0.0
          %385 = vmatprep.subr.mxu0 0.0
          %386 = vmatpush1.msra.mxu0 0.0
          %387 = vmatprep.subr.mxu0 0.0
          %388 = vmatpush1.msra.mxu0 0.0
          %389 = vmatprep.subr.mxu0 0.0
          %390 = vmatpush1.msra.mxu0 0.0
          %391 = vmatprep.subr.mxu0 0.0
          %392 = vmatpush1.msra.mxu0 0.0
          %393 = vmatprep.subr.mxu0 0.0
          %394 = vmatpush1.msra.mxu0 0.0
          %395 = vmatprep.subr.mxu0 0.0
          %396 = vmatpush1.msra.mxu0 0.0
          %397 = vmatprep.subr.mxu0 0.0
          %398 = vmatpush1.msra.mxu0 0.0
          %399 = vmatprep.subr.mxu0 0.0
          %400 = vmatpush1.msra.mxu0 0.0
          %401 = vmatprep.subr.mxu0 0.0
          %402 = vmatpush1.msra.mxu0 0.0
          %403 = vmatprep.subr.mxu0 0.0
          %404 = vmatpush1.msra.mxu0 0.0
          %405 = vmatprep.mubr.f32.mxu0 0.0
          %406 = vmatmul.mubr.f32.gmra.mrb[0].mxu0 %v318
          %v407 = vpop.f32.mrb[0].mxu0
          %v408 = vadd.f32 0.0, %v407
          %v409 = vpop.f32.mrb[0].mxu0
          %410 = vmatprep.mubr.f32.mxu0 0.0
          %411 = vmatmul.mubr.f32.gmra.mrb[0].mxu0 %v321
          %v412 = vpop.f32.mrb[0].mxu0
          %v413 = vadd.f32 0.0, %v412
          %v414 = vpop.f32.mrb[0].mxu0
          %415 = vmatprep.mubr.f32.mxu0 0.0
          %416 = vmatmul.mubr.f32.gmra.mrb[0].mxu0 %v324
          %v417 = vpop.f32.mrb[0].mxu0
          %v418 = vadd.f32 0.0, %v417
          %v419 = vpop.f32.mrb[0].mxu0
          %420 = vmatprep.mubr.f32.mxu0 0.0
          %421 = vmatmul.mubr.f32.gmra.mrb[0].mxu0 %v327
          %v422 = vpop.f32.mrb[0].mxu0
          %v423 = vadd.f32 0.0, %v422
          %v424 = vpop.f32.mrb[0].mxu0
          %425 = vmatprep.mubr.f32.mxu0 0.0
          %426 = vmatmul.mubr.f32.gmra.mrb[0].mxu0 %v330
          %v427 = vpop.f32.mrb[0].mxu0
          %v428 = vadd.f32 0.0, %v427
          %v429 = vpop.f32.mrb[0].mxu0
          %430 = vmatprep.mubr.f32.mxu0 0.0
          %431 = vmatmul.mubr.f32.gmra.mrb[0].mxu0 %v333
          %v432 = vpop.f32.mrb[0].mxu0
          %v433 = vadd.f32 0.0, %v432
          %v434 = vpop.f32.mrb[0].mxu0
          %435 = vmatprep.mubr.f32.mxu0 0.0
          %436 = vmatmul.mubr.f32.gmra.mrb[0].mxu0 %v336
          %v437 = vpop.f32.mrb[0].mxu0
          %v438 = vadd.f32 0.0, %v437
          %v439 = vpop.f32.mrb[0].mxu0
          %440 = vmatprep.mubr.f32.mxu0 0.0
          %441 = vmatmul.mubr.f32.gmra.mrb[0].mxu0 %v339
          %v442 = vpop.f32.mrb[0].mxu0
          %v443 = vadd.f32 0.0, %v442
          %v444 = vpop.f32.mrb[0].mxu0
          %445 = vdwg.mxu0
          %p446 = scmp.lt.s32.totalorder %s142, 16
          %s447 = scalar_select %p446, 1.0, 0.0
          %v448 = vsub.f32 %v279, %v408
          %v449 = vsub.f32 %v284, %v413
          %v450 = vsub.f32 %v289, %v418
          %v451 = vsub.f32 %v294, %v423
          %v452 = vsub.f32 %v299, %v428
          %v453 = vsub.f32 %v304, %v433
          %v454 = vsub.f32 %v309, %v438
          %v455 = vsub.f32 %v314, %v443
          %v456 = vand.u32 2147483647, %v448
          %v457 = vand.u32 2147483647, %v449
          %v458 = vand.u32 2147483647, %v450
          %v459 = vand.u32 2147483647, %v451
          %v460 = vand.u32 2147483647, %v452
          %v461 = vand.u32 2147483647, %v453
          %v462 = vand.u32 2147483647, %v454
          %v463 = vand.u32 2147483647, %v455
          %vm464 = vcmask 64512
          %v465 = vsel %vm464, %v456, 0.0
          %v466 = vsel %vm464, %v457, 0.0
          %v467 = vadd.f32 %v465, %v466
          %v468 = vsel %vm464, %v458, 0.0
          %v469 = vadd.f32 %v467, %v468
          %v470 = vsel %vm464, %v459, 0.0
          %v471 = vadd.f32 %v469, %v470
          %v472 = vsel %vm464, %v460, 0.0
          %v473 = vadd.f32 %v471, %v472
          %v474 = vsel %vm464, %v461, 0.0
          %v475 = vadd.f32 %v473, %v474
          %v476 = vsel %vm464, %v462, 0.0
          %v477 = vadd.f32 %v475, %v476
          %v478 = vsel %vm464, %v463, 0.0
          %v479 = vadd.f32 %v477, %v478
          %480 = vadd.xlane.f32.xlu0 %v479
          %v481 = vpop.xlane.xlu0 %480
          %v482 = vrot.slane %v481, 4
          %v483 = vadd.f32 %v481, %v482
          %v484 = vrot.slane %v483, 2
          %v485 = vadd.f32 %v483, %v484
          %v486 = vrot.slane %v485, 1
          %v487 = vadd.f32 %v485, %v486
          %s488 = vtos %v487
          %s489 = smul.f32 %s447, %s488
          %s490 = sadd.f32 %s141, %s489
        $region33: #{tpu_custom_call.1} parent=27 // loop_footer
          %s140 = sadd.s32 1, %s136
        $region34: #{tpu_custom_call.1} parent=27 // loop_footer_branch
          %135 = sbr.rel target = $region30
        $region35: #{tpu_custom_call.1} parent=27 // loop_exit
          _
        %v491 = vstv %s141
        %492 = vst [vmem:[%s128] sm:$0xff] %v491
        %s493 = sand.u32 %s73, 1
        %s494 = scalar_lea.sflag [#allocation5], %s493
        %s495 = sand.u32 %s73, 1
        %s496 = smul.addr %s495, 8
        %s497 = scalar_lea.vmem [#allocation4], %s496
        // Predicated region
        $region36: #{tpu_custom_call.1} parent=27 // pred_check
          %p498 = pneg %p83
        $region37: #{tpu_custom_call.1} parent=27 // pred_check_branch
          %500 = sbr.rel (%p498) target = $region39
        $region38: #{tpu_custom_call.1} parent=27 // pred_region
          %s502 = ssub.s32 128, 128
          %503 = vsyncadd %s494, %s502
          %s504 = smul.addr %s23, 128
          %s505 = scalar_lea.hbm %s3, %s504
          %s507 = sshll.u32 %s497, 4
          %s508 = int_to_ptr.vmem [resolvable:$true] %s507
          %510 = dma.vmem_to_hbm [thread:$0]  %s508, 128, %s505, %s494
        $region39: #{tpu_custom_call.1} parent=27 // pred_fallthru
          _
      $region28: #{tpu_custom_call.1} parent=5 // pred_fallthru
        _
      %p511 = scmp.le.s32.totalorder 2, %s18
      // Predicated region
      $region40: #{tpu_custom_call.1} parent=5 // pred_check
        %p512 = pneg %p511
      $region41: #{tpu_custom_call.1} parent=5 // pred_check_branch
        %514 = sbr.rel (%p512) target = $region43
      $region42: #{tpu_custom_call.1} parent=5 // pred_region
        %s515 = ssub.s32 %s18, 2
        // Predicated region
        $region44: #{tpu_custom_call.1} parent=42 // pred_check
          %p516 = pneg %p89
        $region45: #{tpu_custom_call.1} parent=42 // pred_check_branch
          %518 = sbr.rel (%p516) target = $region47
        $region46: #{tpu_custom_call.1} parent=42 // pred_region
          %s519 = sand.u32 %s74, 1
          %s520 = scalar_lea.sflag [#allocation5], %s519
          %s521 = sand.u32 %s74, 1
          %s522 = smul.addr %s521, 8
          %s523 = scalar_lea.vmem [#allocation4], %s522
          %524 = dma.done %s520, 128
        $region47: #{tpu_custom_call.1} parent=42 // pred_fallthru
          _
      $region43: #{tpu_custom_call.1} parent=5 // pred_fallthru
        _
    $region6: #{tpu_custom_call.1} parent=1 // loop_footer
      %s22 = sadd.s32 1, %s18
    $region7: #{tpu_custom_call.1} parent=1 // loop_footer_branch
      %17 = sbr.rel target = $region3
    $region8: #{tpu_custom_call.1} parent=1 // loop_exit
      _
    %525 = vsyncpa [#allocation5], 1
    %s526 = scalar_lea.sflag [#allocation5], 1
    %527 = vsyncpa %s526, 1

</llo_original>
